<compile_context>
chip_gen: v7x
topology: tpu7x:2x2x1
jax: 0.10.0
libtpu: 0.0.40
codegen_flags: <defaults>
</compile_context>

<pallas_src>
import functools

import jax
import jax.numpy as jnp
from jax.experimental import pallas as pl
from jax.experimental.pallas import tpu as pltpu

TARGET_BLOCK_BYTES = 4 << 20       # ~4 MiB per block, dtype independent
SINGLE_BLOCK_MAX_BYTES = 1 << 20   # below this: one block, no pipelining
VMEM_LIMIT_BYTES = 40 << 20        # headroom under v7x's 64 MiB physical VMEM
LANE_CANDIDATES = (1024, 512, 256, 128)


def _actlog_kernel(x_ref, o_ref, *, eps):
    x = x_ref[...]
    o_ref[...] = jnp.log(jnp.maximum(x, jnp.asarray(eps, x.dtype)))


def _round_up(a, b):
    return ((a + b - 1) // b) * b


@functools.partial(jax.jit, static_argnames=("eps",))
def act_log(x, eps=1e-6):
    """y = log(clamp(x, min=eps)) via a Pallas TPU kernel. Any shape / float dtype."""
    orig_shape = x.shape
    dtype = x.dtype
    n = x.size
    itemsize = jnp.dtype(dtype).itemsize
    total_bytes = n * itemsize

    kernel = functools.partial(_actlog_kernel, eps=eps)
    params = pltpu.CompilerParams(
        dimension_semantics=("parallel",),
        vmem_limit_bytes=VMEM_LIMIT_BYTES,
    )
    cost = pl.CostEstimate(
        flops=n,                 # the clamp (max) on the VPU
        transcendentals=n,       # the log on the EUP
        bytes_accessed=2 * total_bytes,
    )

    flat = jnp.ravel(x)

    # Pick the widest lane width that divides n -> no padding, no back-slice.
    lane = next((c for c in LANE_CANDIDATES if n % c == 0), 0)

    if lane:
        # ---- 2-D lane-dense slab path (no pad, ragged last row-block) ----
        rows = n // lane
        row_bytes = lane * itemsize
        sub = 8 * max(1, 4 // itemsize)            # sublane packing: 8/16/32
        if total_bytes <= SINGLE_BLOCK_MAX_BYTES:
            block_rows = rows                      # single block == full array
        else:
            target_rows = max(sub, TARGET_BLOCK_BYTES // row_bytes)
            # keep >= 2 grid steps so both v7x TensorCores get work
            half_rows = _round_up(pl.cdiv(rows, 2), sub)
            block_rows = int(min(target_rows, half_rows))
        slab = flat.reshape(rows, lane)
        out = pl.pallas_call(
            kernel,
            out_shape=jax.ShapeDtypeStruct((rows, lane), dtype),
            grid=(pl.cdiv(rows, block_rows),),
            in_specs=[pl.BlockSpec((block_rows, lane), lambda i: (i, 0))],
            out_specs=pl.BlockSpec((block_rows, lane), lambda i: (i, 0)),
            compiler_params=params,
            cost_estimate=cost,
        )(slab)
        return out.reshape(orig_shape)

    # ---- general 1-D fallback (n not a multiple of 128): no pad either; ----
    # ---- the ragged last block is masked by Pallas (no reductions here). ----
    if total_bytes <= SINGLE_BLOCK_MAX_BYTES or n < 128:
        block_elems = n                            # whole array, single block
    else:
        target_elems = max(128, (TARGET_BLOCK_BYTES // itemsize) // 128 * 128)
        block_elems = int(min(target_elems, (n // 128) * 128))
    out = pl.pallas_call(
        kernel,
        out_shape=jax.ShapeDtypeStruct((n,), dtype),
        grid=(pl.cdiv(n, block_elems),),
        in_specs=[pl.BlockSpec((block_elems,), lambda i: (i,))],
        out_specs=pl.BlockSpec((block_elems,), lambda i: (i,)),
        compiler_params=params,
        cost_estimate=cost,
    )(flat)
    return out.reshape(orig_shape)


if __name__ == "__main__":
    key = jax.random.PRNGKey(0)
    # NCHW input like a conv activation: batch=2, channels=4, H=16, W=16
    x = jax.random.normal(key, (2, 4, 16, 16), dtype=jnp.float32)

    y = jax.block_until_ready(act_log(x, eps=1e-6))

    # reference check (plain JAX)
    y_ref = jnp.log(jnp.maximum(x, 1e-6))
    assert y.shape == x.shape and y.dtype == x.dtype
    assert jnp.allclose(y, y_ref, atol=1e-6, rtol=1e-6)

    print("KERNEL_OK")
</pallas_src>

<mosaic_0001>
module attributes {stable_mosaic.version = 11 : i64} {
  func.func @_actlog_kernel(%arg0: i32, %arg1: memref<2x1024xf32, #tpu.memory_space<vmem>>, %arg2: memref<2x1024xf32, #tpu.memory_space<vmem>>) attributes {dimension_semantics = [#tpu.dimension_semantics<parallel>], iteration_bounds = array<i64: 1>, scalar_prefetch = 0 : i64, scratch_operands = 0 : i64, tpu.core_type = #tpu.core_type<tc>, window_params = [{transform_indices = @transform_0, window_bounds = array<i64: 2, 1024>}, {transform_indices = @transform_1, window_bounds = array<i64: 2, 1024>}]} {
    %c0 = arith.constant 0 : index
    %c0_0 = arith.constant 0 : index
    %0 = vector.load %arg1[%c0, %c0_0] : memref<2x1024xf32, #tpu.memory_space<vmem>>, vector<2x1024xf32>
    %cst = arith.constant 9.99999997E-7 : f32
    %1 = vector.broadcast %cst : f32 to vector<2x1024xf32>
    %2 = arith.maximumf %0, %1 : vector<2x1024xf32>
    %3 = math.log %2 : vector<2x1024xf32>
    %c0_1 = arith.constant 0 : index
    %c0_2 = arith.constant 0 : index
    %4 = vector.load %arg2[%c0_1, %c0_2] : memref<2x1024xf32, #tpu.memory_space<vmem>>, vector<2x1024xf32>
    tpu.vector_store %arg2[%c0_1, %c0_2], %3 {strides = array<i32>} : memref<2x1024xf32, #tpu.memory_space<vmem>>, vector<2x1024xf32>,
    return
  }
  func.func @transform_0(%arg0: i32) -> (i32, i32) {
    %c0_i32 = arith.constant 0 : i32
    %c0_i32_0 = arith.constant 0 : i32
    return %arg0, %c0_i32 : i32, i32
  }
  func.func @transform_1(%arg0: i32) -> (i32, i32) {
    %c0_i32 = arith.constant 0 : i32
    %c0_i32_0 = arith.constant 0 : i32
    return %arg0, %c0_i32 : i32, i32
  }
}

</mosaic_0001>

<llo_original>
// kernel: act_log.1
$region0: #{act_log.1}
  #allocation0 [shape = 'u32[]', space=smem, size = 0x4, offset = 0x4, fixed_abs, tag = 'smem constant byte address 0x4 - core index']
  #allocation1 [shape = 'u32[144,128]{1,0:T(1,128)}', space=vmem, size = 0x12000, scoped, tag = 'internal scratch']
  %s0 = inlined_call_operand.vmem [shape: f32[2,1024], index: 0, kind: input, shape index: {}]
  %s1 = inlined_call_operand.vmem [shape: f32[2,1024], index: 1, kind: output, shape index: {}]
  %s2 = sld [smem:[#allocation0]]
  $region14: #{act_log.1} parent=0
    _
  %s4 = ssub.s32 1, %s2
  %s5 = scalar_select 0, %s4, %s2
  // Predicated region
  $region2: #{act_log.1} parent=0 // pred_check
    _
  $region3: #{act_log.1} parent=0 // pred_check_branch
    %7 = sbr.rel (0) target = $region5
  $region4: #{act_log.1} parent=0 // pred_region
    _
  $region5: #{act_log.1} parent=0 // pred_fallthru
    _
  %v8 = vld [vmem:[%s0] sm:$0xff]
  %v9 = vld [vmem:[%s0 + $0x8] sm:$0xff]
  %v10 = vmax.f32 %v8, 1e-06
  %v11 = vmax.f32 %v9, 1e-06
  %v12 = vlog2.pop %v10
  %v13 = vmul.f32 %v12, 0.6931472
  %v14 = vlog2.pop %v11
  %v15 = vmul.f32 %v14, 0.6931472
  %16 = vst [vmem:[%s1] sm:$0xff] %v13
  %17 = vst [vmem:[%s1 + $0x8] sm:$0xff] %v15
  // Predicated region
  $region6: #{act_log.1} parent=0 // pred_check
    _
  $region7: #{act_log.1} parent=0 // pred_check_branch
    %19 = sbr.rel (0) target = $region9
  $region8: #{act_log.1} parent=0 // pred_region
    _
  $region9: #{act_log.1} parent=0 // pred_fallthru
    _
  // Predicated region
  $region10: #{act_log.1} parent=0 // pred_check
    _
  $region11: #{act_log.1} parent=0 // pred_check_branch
    %21 = sbr.rel (0) target = $region13
  $region12: #{act_log.1} parent=0 // pred_region
    _
  $region13: #{act_log.1} parent=0 // pred_fallthru
    _

</llo_original>
